<compile_context>
chip_gen: v7x
topology: tpu7x:2x2x1
jax: 0.10.0
libtpu: 0.0.40
codegen_flags: <defaults>
</compile_context>

<pallas_src>
from functools import partial

import jax
import jax.numpy as jnp
from jax.experimental import pallas as pl
from jax.experimental.pallas import tpu as pltpu

NUM_FEATURES = 9
H1, H2, H3, OUT = 20, 40, 20, 2
LANE = 128


def _round_up(x, m):
    return ((x + m - 1) // m) * m


def _prelu(x, a):
    # PReLU(x) = x if x > 0 else a * x   (single shared learnable scalar slope)
    return jnp.where(x > 0, x, a * x)


def value_model_kernel(x_ref,
                       w1_ref, b1_ref,
                       w2_ref, b2_ref,
                       w3_ref, b3_ref,
                       w4_ref, b4_ref,
                       a_ref,
                       o_ref,
                       *, compute_dtype):
    a = a_ref[0, 0]

    x = x_ref[...].astype(compute_dtype)                # (T, 9): seq on sublanes

    # Layer 1: contract the 9-wide feature axis of BOTH operands (W1 . X^T).
    # This moves seq onto the LANE axis, so layers 2..4, the bias adds, the
    # PReLUs and the final store are all lane-dense.
    h = jax.lax.dot_general(
        w1_ref[...], x, (((1,), (1,)), ((), ())),
        preferred_element_type=jnp.float32) + b1_ref[...]
    h = _prelu(h, a)                                     # (20, T)  f32

    h = jnp.dot(w2_ref[...], h.astype(compute_dtype),
                preferred_element_type=jnp.float32) + b2_ref[...]
    h = _prelu(h, a)                                     # (40, T)

    h = jnp.dot(w3_ref[...], h.astype(compute_dtype),
                preferred_element_type=jnp.float32) + b3_ref[...]
    h = _prelu(h, a)                                     # (20, T)

    out = jnp.dot(w4_ref[...], h.astype(compute_dtype),
                  preferred_element_type=jnp.float32) + b4_ref[...]
    o_ref[...] = out.astype(o_ref.dtype)                 # (2, T) lane-dense store


def _choose_tile_seq(seq, max_tile_seq):
    """Pick the seq tile: big tiles to amortize per-grid-step overhead, multiples
    of 512 for clean 256-wide MXU result passes and lane alignment, and capped so
    that >= 2 tiles exist for large seq (lets v7x shard the grid over both TCs)."""
    seq_aligned = _round_up(max(seq, 1), LANE)
    if seq_aligned <= 512:
        return seq_aligned                     # single small lane-aligned tile
    cap = max(512, _round_up(max_tile_seq, 512))
    half = _round_up((seq_aligned + 1) // 2, 512)
    return min(cap, half)


def value_model_forward(features, params, *, max_tile_seq=8192,
                        use_bf16=False, transpose_output=True):
    """features: (B, seq, NUM_FEATURES). Mirrors PyTorch forward: uses features[0].

    max_tile_seq : seq-tile cap (rounded to a multiple of 512). 8192 keeps per-tile
                   VMEM at a few MiB (far under v7x's 64 MiB) while minimizing the
                   number of grid steps.
    use_bf16     : cast matmul operands to bf16 (f32 accumulation / bias / PReLU).
    transpose_output : True  -> (seq, 2), matches the PyTorch module.
                       False -> (2, seq) lane-dense layout (no epilogue relayout).
    """
    x = features[0]                                      # (seq, NUM_FEATURES)
    seq = x.shape[0]
    (w1, b1), (w2, b2), (w3, b3), (w4, b4), a = params   # weights: (out, in)

    compute_dtype = jnp.bfloat16 if use_bf16 else jnp.float32
    tile_seq = _choose_tile_seq(seq, max_tile_seq)
    num_tiles = max(1, (seq + tile_seq - 1) // tile_seq)  # tail block is masked

    x = x.astype(jnp.float32)                            # no-op if already f32

    def col(b):                                          # bias as (out, 1) column
        return b.reshape(-1, 1).astype(jnp.float32)

    def wmat(w):                                         # matmul operand dtype
        return w.astype(compute_dtype)

    def resident(shape):                                 # VMEM-resident across tiles
        return pl.BlockSpec(shape, lambda i: (0, 0))

    out = pl.pallas_call(
        partial(value_model_kernel, compute_dtype=compute_dtype),
        out_shape=jax.ShapeDtypeStruct((OUT, seq), jnp.float32),
        grid=(num_tiles,),
        in_specs=[
            pl.BlockSpec((tile_seq, NUM_FEATURES), lambda i: (i, 0)),   # x tile (natural layout)
            resident((H1, NUM_FEATURES)), resident((H1, 1)),            # w1, b1
            resident((H2, H1)),           resident((H2, 1)),            # w2, b2
            resident((H3, H2)),           resident((H3, 1)),            # w3, b3
            resident((OUT, H3)),          resident((OUT, 1)),           # w4, b4
            pl.BlockSpec(memory_space=pltpu.MemorySpace.SMEM),          # PReLU slope
        ],
        out_specs=pl.BlockSpec((OUT, tile_seq), lambda i: (0, i)),
        compiler_params=pltpu.CompilerParams(
            dimension_semantics=("parallel",),            # v7x: shard tiles over 2 TCs
            vmem_limit_bytes=32 * 1024 * 1024,            # safe on v5e/v6e/v7x
        ),
    )(x,
      wmat(w1), col(b1),
      wmat(w2), col(b2),
      wmat(w3), col(b3),
      wmat(w4), col(b4),
      a)

    if transpose_output:
        return out.T                                     # (seq, 2) PyTorch orientation
    return out                                           # (2, seq) lane-dense


def init_params(key):
    """Deterministic parameter init (PyTorch Linear-style uniform bounds).
    Weights are stored in native PyTorch (out, in) layout."""
    def linear(key, fan_in, fan_out):
        kw, kb = jax.random.split(key)
        bound = 1.0 / (fan_in ** 0.5)
        w = jax.random.uniform(kw, (fan_out, fan_in), jnp.float32, -bound, bound)
        b = jax.random.uniform(kb, (fan_out,), jnp.float32, -bound, bound)
        return w, b

    k1, k2, k3, k4 = jax.random.split(key, 4)
    p1 = linear(k1, NUM_FEATURES, H1)
    p2 = linear(k2, H1, H2)
    p3 = linear(k3, H2, H3)
    p4 = linear(k4, H3, OUT)
    a = jnp.full((1, 1), 0.25, jnp.float32)              # PReLU default init
    return (p1, p2, p3, p4, a)


def reference_forward(features, params):
    """Pure-JAX reference for correctness check (weights are (out, in))."""
    (w1, b1), (w2, b2), (w3, b3), (w4, b4), a = params
    a = a[0, 0]
    x = features[0]
    h = x @ w1.T + b1
    h = jnp.where(h > 0, h, a * h)
    h = h @ w2.T + b2
    h = jnp.where(h > 0, h, a * h)
    h = h @ w3.T + b3
    h = jnp.where(h > 0, h, a * h)
    return h @ w4.T + b4


if __name__ == "__main__":
    key = jax.random.PRNGKey(0)
    kx, kp, kx2 = jax.random.split(key, 3)

    params = init_params(kp)

    # Small demo shape consistent with the module: batch=2, seq=8, 9 features.
    batch, seq = 2, 8
    features = jax.random.normal(kx, (batch, seq, NUM_FEATURES), jnp.float32)

    out = jax.block_until_ready(value_model_forward(features, params))
    ref = reference_forward(features, params)
    assert out.shape == (seq, OUT), out.shape
    assert jnp.allclose(out, ref, atol=2e-4, rtol=2e-4), "mismatch vs reference (small)"

    # Multi-tile + masked tail: seq=600 -> tile 512, 2 grid steps (also exercises
    # the >=2-tile path that lets v7x engage both TensorCores).
    seq2 = 600
    features2 = jax.random.normal(kx2, (batch, seq2, NUM_FEATURES), jnp.float32)
    out2 = jax.block_until_ready(value_model_forward(features2, params))
    ref2 = reference_forward(features2, params)
    assert out2.shape == (seq2, OUT), out2.shape
    assert jnp.allclose(out2, ref2, atol=2e-4, rtol=2e-4), "mismatch vs reference (tiled)"

    # Lane-dense (2, seq) output path (skips the epilogue transpose entirely).
    out2_ld = jax.block_until_ready(
        value_model_forward(features2, params, transpose_output=False))
    assert out2_ld.shape == (OUT, seq2), out2_ld.shape
    assert jnp.allclose(out2_ld.T, ref2, atol=2e-4, rtol=2e-4), "mismatch (lane-dense out)"

    # Optional bf16-operand MXU path (accumulation / bias / PReLU stay f32).
    out2_bf16 = jax.block_until_ready(
        value_model_forward(features2, params, use_bf16=True))
    assert out2_bf16.shape == (seq2, OUT), out2_bf16.shape
    assert jnp.allclose(out2_bf16, ref2, atol=5e-2, rtol=5e-2), "mismatch (bf16 path)"

    print("KERNEL_OK")
</pallas_src>

<mosaic_0001>
module attributes {stable_mosaic.version = 11 : i64} {
  func.func @value_model_kernel(%arg0: i32, %arg1: memref<128x9xf32, #tpu.memory_space<vmem>>, %arg2: memref<20x9xf32, #tpu.memory_space<vmem>>, %arg3: memref<20x1xf32, #tpu.memory_space<vmem>>, %arg4: memref<40x20xf32, #tpu.memory_space<vmem>>, %arg5: memref<40x1xf32, #tpu.memory_space<vmem>>, %arg6: memref<20x40xf32, #tpu.memory_space<vmem>>, %arg7: memref<20x1xf32, #tpu.memory_space<vmem>>, %arg8: memref<2x20xf32, #tpu.memory_space<vmem>>, %arg9: memref<2x1xf32, #tpu.memory_space<vmem>>, %arg10: memref<1x1xf32, #tpu.memory_space<smem>>, %arg11: memref<2x128xf32, #tpu.memory_space<vmem>>) attributes {dimension_semantics = [#tpu.dimension_semantics<parallel>], iteration_bounds = array<i64: 1>, scalar_prefetch = 0 : i64, scratch_operands = 0 : i64, tpu.core_type = #tpu.core_type<tc>, window_params = [{transform_indices = @transform_0, window_bounds = array<i64: 128, 9>}, {pipeline_mode = #tpu.pipeline_mode<synchronous>, transform_indices = @transform_1, window_bounds = array<i64: 20, 9>}, {pipeline_mode = #tpu.pipeline_mode<synchronous>, transform_indices = @transform_2, window_bounds = array<i64: 20, 1>}, {pipeline_mode = #tpu.pipeline_mode<synchronous>, transform_indices = @transform_3, window_bounds = array<i64: 40, 20>}, {pipeline_mode = #tpu.pipeline_mode<synchronous>, transform_indices = @transform_4, window_bounds = array<i64: 40, 1>}, {pipeline_mode = #tpu.pipeline_mode<synchronous>, transform_indices = @transform_5, window_bounds = array<i64: 20, 40>}, {pipeline_mode = #tpu.pipeline_mode<synchronous>, transform_indices = @transform_6, window_bounds = array<i64: 20, 1>}, {pipeline_mode = #tpu.pipeline_mode<synchronous>, transform_indices = @transform_7, window_bounds = array<i64: 2, 20>}, {pipeline_mode = #tpu.pipeline_mode<synchronous>, transform_indices = @transform_8, window_bounds = array<i64: 2, 1>}, {transform_indices = @transform_9, window_bounds = array<i64: 1, 1>}, {transform_indices = @transform_10, window_bounds = array<i64: 2, 128>}]} {
    %c0 = arith.constant 0 : index
    %c0_0 = arith.constant 0 : index
    %0 = memref.load %arg10[%c0, %c0_0] : memref<1x1xf32, #tpu.memory_space<smem>>
    %c0_1 = arith.constant 0 : index
    %c0_2 = arith.constant 0 : index
    %1 = vector.load %arg1[%c0_1, %c0_2] : memref<128x9xf32, #tpu.memory_space<vmem>>, vector<128x9xf32>
    %c0_3 = arith.constant 0 : index
    %c0_4 = arith.constant 0 : index
    %2 = vector.load %arg2[%c0_3, %c0_4] : memref<20x9xf32, #tpu.memory_space<vmem>>, vector<20x9xf32>
    %cst = arith.constant dense<0.000000e+00> : vector<20x128xf32>
    %3 = tpu.matmul %2, %1, %cst {dimension_numbers = #tpu.dot_dimension_numbers<[1], [1], [0], [0], [0, 0, 1, 0], [], []>} : vector<20x9xf32>, vector<128x9xf32>, vector<20x128xf32> -> vector<20x128xf32>
    %c0_5 = arith.constant 0 : index
    %c0_6 = arith.constant 0 : index
    %4 = vector.load %arg3[%c0_5, %c0_6] : memref<20x1xf32, #tpu.memory_space<vmem>>, vector<20x1xf32>
    %5 = vector.broadcast %4 : vector<20x1xf32> to vector<20x128xf32>
    %6 = arith.addf %3, %5 : vector<20x128xf32>
    %cst_7 = arith.constant 0.000000e+00 : f32
    %7 = vector.broadcast %cst_7 : f32 to vector<20x128xf32>
    %8 = arith.cmpf ogt, %6, %7 : vector<20x128xf32>
    %9 = vector.broadcast %0 : f32 to vector<20x128xf32>
    %10 = arith.mulf %9, %6 : vector<20x128xf32>
    %11 = arith.select %8, %6, %10 : vector<20x128xi1>, vector<20x128xf32>
    %c0_8 = arith.constant 0 : index
    %c0_9 = arith.constant 0 : index
    %12 = vector.load %arg4[%c0_8, %c0_9] : memref<40x20xf32, #tpu.memory_space<vmem>>, vector<40x20xf32>
    %cst_10 = arith.constant dense<0.000000e+00> : vector<40x128xf32>
    %13 = tpu.matmul %12, %11, %cst_10 {dimension_numbers = #tpu.dot_dimension_numbers<[1], [0], [0], [1], [0, 0, 1, 1], [], []>} : vector<40x20xf32>, vector<20x128xf32>, vector<40x128xf32> -> vector<40x128xf32>
    %c0_11 = arith.constant 0 : index
    %c0_12 = arith.constant 0 : index
    %14 = vector.load %arg5[%c0_11, %c0_12] : memref<40x1xf32, #tpu.memory_space<vmem>>, vector<40x1xf32>
    %15 = vector.broadcast %14 : vector<40x1xf32> to vector<40x128xf32>
    %16 = arith.addf %13, %15 : vector<40x128xf32>
    %cst_13 = arith.constant 0.000000e+00 : f32
    %17 = vector.broadcast %cst_13 : f32 to vector<40x128xf32>
    %18 = arith.cmpf ogt, %16, %17 : vector<40x128xf32>
    %19 = vector.broadcast %0 : f32 to vector<40x128xf32>
    %20 = arith.mulf %19, %16 : vector<40x128xf32>
    %21 = arith.select %18, %16, %20 : vector<40x128xi1>, vector<40x128xf32>
    %c0_14 = arith.constant 0 : index
    %c0_15 = arith.constant 0 : index
    %22 = vector.load %arg6[%c0_14, %c0_15] : memref<20x40xf32, #tpu.memory_space<vmem>>, vector<20x40xf32>
    %cst_16 = arith.constant dense<0.000000e+00> : vector<20x128xf32>
    %23 = tpu.matmul %22, %21, %cst_16 {dimension_numbers = #tpu.dot_dimension_numbers<[1], [0], [0], [1], [0, 0, 1, 1], [], []>} : vector<20x40xf32>, vector<40x128xf32>, vector<20x128xf32> -> vector<20x128xf32>
    %c0_17 = arith.constant 0 : index
    %c0_18 = arith.constant 0 : index
    %24 = vector.load %arg7[%c0_17, %c0_18] : memref<20x1xf32, #tpu.memory_space<vmem>>, vector<20x1xf32>
    %25 = vector.broadcast %24 : vector<20x1xf32> to vector<20x128xf32>
    %26 = arith.addf %23, %25 : vector<20x128xf32>
    %cst_19 = arith.constant 0.000000e+00 : f32
    %27 = vector.broadcast %cst_19 : f32 to vector<20x128xf32>
    %28 = arith.cmpf ogt, %26, %27 : vector<20x128xf32>
    %29 = vector.broadcast %0 : f32 to vector<20x128xf32>
    %30 = arith.mulf %29, %26 : vector<20x128xf32>
    %31 = arith.select %28, %26, %30 : vector<20x128xi1>, vector<20x128xf32>
    %c0_20 = arith.constant 0 : index
    %c0_21 = arith.constant 0 : index
    %32 = vector.load %arg8[%c0_20, %c0_21] : memref<2x20xf32, #tpu.memory_space<vmem>>, vector<2x20xf32>
    %cst_22 = arith.constant dense<0.000000e+00> : vector<2x128xf32>
    %33 = tpu.matmul %32, %31, %cst_22 {dimension_numbers = #tpu.dot_dimension_numbers<[1], [0], [0], [1], [0, 0, 1, 1], [], []>} : vector<2x20xf32>, vector<20x128xf32>, vector<2x128xf32> -> vector<2x128xf32>
    %c0_23 = arith.constant 0 : index
    %c0_24 = arith.constant 0 : index
    %34 = vector.load %arg9[%c0_23, %c0_24] : memref<2x1xf32, #tpu.memory_space<vmem>>, vector<2x1xf32>
    %35 = vector.broadcast %34 : vector<2x1xf32> to vector<2x128xf32>
    %36 = arith.addf %33, %35 : vector<2x128xf32>
    %c0_25 = arith.constant 0 : index
    %c0_26 = arith.constant 0 : index
    %37 = vector.load %arg11[%c0_25, %c0_26] : memref<2x128xf32, #tpu.memory_space<vmem>>, vector<2x128xf32>
    tpu.vector_store %arg11[%c0_25, %c0_26], %36 {strides = array<i32>} : memref<2x128xf32, #tpu.memory_space<vmem>>, vector<2x128xf32>,
    return
  }
  func.func @transform_0(%arg0: i32) -> (i32, i32) {
    %c0_i32 = arith.constant 0 : i32
    %c0_i32_0 = arith.constant 0 : i32
    return %arg0, %c0_i32 : i32, i32
  }
  func.func @transform_1(%arg0: i32) -> (i32, i32) {
    %c0_i32 = arith.constant 0 : i32
    %c0_i32_0 = arith.constant 0 : i32
    %c0_i32_1 = arith.constant 0 : i32
    return %c0_i32, %c0_i32_0 : i32, i32
  }
  func.func @transform_2(%arg0: i32) -> (i32, i32) {
    %c0_i32 = arith.constant 0 : i32
    %c0_i32_0 = arith.constant 0 : i32
    %c0_i32_1 = arith.constant 0 : i32
    return %c0_i32, %c0_i32_0 : i32, i32
  }
  func.func @transform_3(%arg0: i32) -> (i32, i32) {
    %c0_i32 = arith.constant 0 : i32
    %c0_i32_0 = arith.constant 0 : i32
    %c0_i32_1 = arith.constant 0 : i32
    return %c0_i32, %c0_i32_0 : i32, i32
  }
  func.func @transform_4(%arg0: i32) -> (i32, i32) {
    %c0_i32 = arith.constant 0 : i32
    %c0_i32_0 = arith.constant 0 : i32
    %c0_i32_1 = arith.constant 0 : i32
    return %c0_i32, %c0_i32_0 : i32, i32
  }
  func.func @transform_5(%arg0: i32) -> (i32, i32) {
    %c0_i32 = arith.constant 0 : i32
    %c0_i32_0 = arith.constant 0 : i32
    %c0_i32_1 = arith.constant 0 : i32
    return %c0_i32, %c0_i32_0 : i32, i32
  }
  func.func @transform_6(%arg0: i32) -> (i32, i32) {
    %c0_i32 = arith.constant 0 : i32
    %c0_i32_0 = arith.constant 0 : i32
    %c0_i32_1 = arith.constant 0 : i32
    return %c0_i32, %c0_i32_0 : i32, i32
  }
  func.func @transform_7(%arg0: i32) -> (i32, i32) {
    %c0_i32 = arith.constant 0 : i32
    %c0_i32_0 = arith.constant 0 : i32
    %c0_i32_1 = arith.constant 0 : i32
    return %c0_i32, %c0_i32_0 : i32, i32
  }
  func.func @transform_8(%arg0: i32) -> (i32, i32) {
    %c0_i32 = arith.constant 0 : i32
    %c0_i32_0 = arith.constant 0 : i32
    %c0_i32_1 = arith.constant 0 : i32
    return %c0_i32, %c0_i32_0 : i32, i32
  }
  func.func @transform_9(%arg0: i32) -> (i32, i32) {
    %c0_i32 = arith.constant 0 : i32
    %c0_i32_0 = arith.constant 0 : i32
    %c0_i32_1 = arith.constant 0 : i32
    return %c0_i32, %c0_i32_0 : i32, i32
  }
  func.func @transform_10(%arg0: i32) -> (i32, i32) {
    %c0_i32 = arith.constant 0 : i32
    %c0_i32_0 = arith.constant 0 : i32
    return %c0_i32, %arg0 : i32, i32
  }
}

</mosaic_0001>

<llo_original>
// kernel: tpu_custom_call.1
$region0: #{tpu_custom_call.1}
  #allocation0 [shape = 'u32[]', space=smem, size = 0x4, offset = 0x4, fixed_abs, tag = 'smem constant byte address 0x4 - core index']
  #allocation1 [shape = 'u32[144,128]{1,0:T(1,128)}', space=vmem, size = 0x12000, scoped, tag = 'internal scratch']
  #allocation2 [shape = 'f32[1,1]{1,0:T(1,128)S(6)}', space=smem, size = 0x200, scoped, tag = 'scoped memory for tpu_custom_call.1']
  %s0 = inlined_call_operand.vmem [shape: f32[8,9], index: 0, kind: input, shape index: {}]
  %s1 = inlined_call_operand.vmem [shape: f32[20,9], index: 1, kind: input, shape index: {}]
  %s2 = inlined_call_operand.vmem [shape: f32[20,1], index: 2, kind: input, shape index: {}]
  %s3 = inlined_call_operand.vmem [shape: f32[40,20], index: 3, kind: input, shape index: {}]
  %s4 = inlined_call_operand.vmem [shape: f32[40,1], index: 4, kind: input, shape index: {}]
  %s5 = inlined_call_operand.vmem [shape: f32[20,40], index: 5, kind: input, shape index: {}]
  %s6 = inlined_call_operand.vmem [shape: f32[20,1], index: 6, kind: input, shape index: {}]
  %s7 = inlined_call_operand.vmem [shape: f32[2,20], index: 7, kind: input, shape index: {}]
  %s8 = inlined_call_operand.vmem [shape: f32[2,1], index: 8, kind: input, shape index: {}]
  %s9 = inlined_call_operand.<no memory space> [shape: f32[1,1], index: 9, kind: input, shape index: {}]
  %s10 = inlined_call_operand.hbm [shape: f32[2,8], index: 10, kind: output, shape index: {}]
  %s11 = sld [smem:[#allocation0]]
  $region50: #{tpu_custom_call.1} parent=0
    _
  %s13 = ssub.s32 1, %s11
  %s14 = scalar_select 0, %s13, %s11
  %15 = sst [smem:[#allocation2]] %s9
  $region1: #{tpu_custom_call.1} parent=0
    #allocation3 [shape = 'u8[1024]{0}', space=vmem, size = 0x400, scoped, tag = 'output window, operand 0, single buffered']
    #allocation4 [shape = 's32[1]{0}', space=sflag, size = 0x4, scoped, tag = 'scoped memory for tpu_custom_call.1']
    %16 = vsyncpa [#allocation4], 0
    // Predicated region
    $region2: #{tpu_custom_call.1} parent=1 // pred_check
      _
    $region3: #{tpu_custom_call.1} parent=1 // pred_check_branch
      %18 = sbr.rel (0) target = $region5
    $region4: #{tpu_custom_call.1} parent=1 // pred_region
      _
    $region5: #{tpu_custom_call.1} parent=1 // pred_fallthru
      _
    // Predicated region
    $region6: #{tpu_custom_call.1} parent=1 // pred_check
      _
    $region7: #{tpu_custom_call.1} parent=1 // pred_check_branch
      %20 = sbr.rel (0) target = $region9
    $region8: #{tpu_custom_call.1} parent=1 // pred_region
      _
    $region9: #{tpu_custom_call.1} parent=1 // pred_fallthru
      _
    // Predicated region
    $region10: #{tpu_custom_call.1} parent=1 // pred_check
      _
    $region11: #{tpu_custom_call.1} parent=1 // pred_check_branch
      %22 = sbr.rel (0) target = $region13
    $region12: #{tpu_custom_call.1} parent=1 // pred_region
      _
    $region13: #{tpu_custom_call.1} parent=1 // pred_fallthru
      _
    // Predicated region
    $region14: #{tpu_custom_call.1} parent=1 // pred_check
      _
    $region15: #{tpu_custom_call.1} parent=1 // pred_check_branch
      %24 = sbr.rel (0) target = $region17
    $region16: #{tpu_custom_call.1} parent=1 // pred_region
      _
    $region17: #{tpu_custom_call.1} parent=1 // pred_fallthru
      _
    // Predicated region
    $region18: #{tpu_custom_call.1} parent=1 // pred_check
      _
    $region19: #{tpu_custom_call.1} parent=1 // pred_check_branch
      %26 = sbr.rel (0) target = $region21
    $region20: #{tpu_custom_call.1} parent=1 // pred_region
      _
    $region21: #{tpu_custom_call.1} parent=1 // pred_fallthru
      _
    // Predicated region
    $region22: #{tpu_custom_call.1} parent=1 // pred_check
      _
    $region23: #{tpu_custom_call.1} parent=1 // pred_check_branch
      %28 = sbr.rel (0) target = $region25
    $region24: #{tpu_custom_call.1} parent=1 // pred_region
      _
    $region25: #{tpu_custom_call.1} parent=1 // pred_fallthru
      _
    // Predicated region
    $region26: #{tpu_custom_call.1} parent=1 // pred_check
      _
    $region27: #{tpu_custom_call.1} parent=1 // pred_check_branch
      %30 = sbr.rel (0) target = $region29
    $region28: #{tpu_custom_call.1} parent=1 // pred_region
      _
    $region29: #{tpu_custom_call.1} parent=1 // pred_fallthru
      _
    // Predicated region
    $region30: #{tpu_custom_call.1} parent=1 // pred_check
      _
    $region31: #{tpu_custom_call.1} parent=1 // pred_check_branch
      %32 = sbr.rel (0) target = $region33
    $region32: #{tpu_custom_call.1} parent=1 // pred_region
      _
    $region33: #{tpu_custom_call.1} parent=1 // pred_fallthru
      _
    // Predicated region
    $region34: #{tpu_custom_call.1} parent=1 // pred_check
      _
    $region35: #{tpu_custom_call.1} parent=1 // pred_check_branch
      %34 = sbr.rel (0) target = $region37
    $region36: #{tpu_custom_call.1} parent=1 // pred_region
      _
    $region37: #{tpu_custom_call.1} parent=1 // pred_fallthru
      _
    // Predicated region
    $region38: #{tpu_custom_call.1} parent=1 // pred_check
      _
    $region39: #{tpu_custom_call.1} parent=1 // pred_check_branch
      %36 = sbr.rel (0) target = $region41
    $region40: #{tpu_custom_call.1} parent=1 // pred_region
      _
    $region41: #{tpu_custom_call.1} parent=1 // pred_fallthru
      _
    %s37 = sld [smem:[#allocation2]]
    %v38 = vld [vmem:[%s0] sm:$0xff]
    %v39 = vld [vmem:[%s0 + $0x8] sm:$0xff]
    %v40 = vld [vmem:[%s0 + $0x10] sm:$0xff]
    %v41 = vld [vmem:[%s0 + $0x18] sm:$0xff]
    %v42 = vld [vmem:[%s0 + $0x20] sm:$0xff]
    %v43 = vld [vmem:[%s0 + $0x28] sm:$0xff]
    %v44 = vld [vmem:[%s0 + $0x30] sm:$0xff]
    %v45 = vld [vmem:[%s0 + $0x38] sm:$0xff]
    %v46 = vld [vmem:[%s0 + $0x40] sm:$0xff]
    %v47 = vld [vmem:[%s0 + $0x48] sm:$0xff]
    %v48 = vld [vmem:[%s0 + $0x50] sm:$0xff]
    %v49 = vld [vmem:[%s0 + $0x58] sm:$0xff]
    %v50 = vld [vmem:[%s0 + $0x60] sm:$0xff]
    %v51 = vld [vmem:[%s0 + $0x68] sm:$0xff]
    %v52 = vld [vmem:[%s0 + $0x70] sm:$0xff]
    %v53 = vld [vmem:[%s0 + $0x78] sm:$0xff]
    %v54 = vld [vmem:[%s1] sm:$0xff]
    %v55 = vld [vmem:[%s1 + $0x8] sm:$0xff]
    %v56 = vld [vmem:[%s1 + $0x10] sm:$0xf]
    %v57 = vld [vmem:[%s2] sm:$0xff]
    %v58 = vld [vmem:[%s2 + $0x8] sm:$0xff]
    %v59 = vld [vmem:[%s2 + $0x10] sm:$0xf]
    %61 = vset.pattern.permute.xlu0 0
    %62 = vperm.xlu0 %61, %v57
    %v63 = vpop.permute.xlu0 %62
    %66 = vset.pattern.permute.xlu0 0
    %67 = vperm.xlu0 %66, %v58
    %v68 = vpop.permute.xlu0 %67
    %71 = vset.pattern.permute.xlu0 0
    %72 = vperm.xlu0 %71, %v59
    %v73 = vpop.permute.xlu0 %72
    %vm75 = vcmask 72704
    %v77 = vsel %vm75, %v54, 0
    %v80 = vsel %vm75, %v55, 0
    %v83 = vsel %vm75, %v56, 0
    %v86 = vsel %vm75, %v38, 0
    %v89 = vsel %vm75, %v39, 0
    %v92 = vsel %vm75, %v40, 0
    %v95 = vsel %vm75, %v41, 0
    %v98 = vsel %vm75, %v42, 0
    %v101 = vsel %vm75, %v43, 0
    %v104 = vsel %vm75, %v44, 0
    %v107 = vsel %vm75, %v45, 0
    %v110 = vsel %vm75, %v46, 0
    %v113 = vsel %vm75, %v47, 0
    %v116 = vsel %vm75, %v48, 0
    %v119 = vsel %vm75, %v49, 0
    %v122 = vsel %vm75, %v50, 0
    %v125 = vsel %vm75, %v51, 0
    %v128 = vsel %vm75, %v52, 0
    %v131 = vsel %vm75, %v53, 0
    %133 = vmatprep.subr.mxu0 0.0
    %134 = vmatpush1.xpose.msra.mxu0 %v86
    %135 = vmatprep.subr.mxu0 0.0
    %136 = vmatpush1.xpose.msra.mxu0 %v89
    %137 = vmatprep.subr.mxu0 0.0
    %138 = vmatpush1.xpose.msra.mxu0 %v92
    %139 = vmatprep.subr.mxu0 0.0
    %140 = vmatpush1.xpose.msra.mxu0 %v95
    %141 = vmatprep.subr.mxu0 0.0
    %142 = vmatpush1.xpose.msra.mxu0 %v98
    %143 = vmatprep.subr.mxu0 0.0
    %144 = vmatpush1.xpose.msra.mxu0 %v101
    %145 = vmatprep.subr.mxu0 0.0
    %146 = vmatpush1.xpose.msra.mxu0 %v104
    %147 = vmatprep.subr.mxu0 0.0
    %148 = vmatpush1.xpose.msra.mxu0 %v107
    %149 = vmatprep.subr.mxu0 0.0
    %150 = vmatpush1.xpose.msra.mxu0 %v110
    %151 = vmatprep.subr.mxu0 0.0
    %152 = vmatpush1.xpose.msra.mxu0 %v113
    %153 = vmatprep.subr.mxu0 0.0
    %154 = vmatpush1.xpose.msra.mxu0 %v116
    %155 = vmatprep.subr.mxu0 0.0
    %156 = vmatpush1.xpose.msra.mxu0 %v119
    %157 = vmatprep.subr.mxu0 0.0
    %158 = vmatpush1.xpose.msra.mxu0 %v122
    %159 = vmatprep.subr.mxu0 0.0
    %160 = vmatpush1.xpose.msra.mxu0 %v125
    %161 = vmatprep.subr.mxu0 0.0
    %162 = vmatpush1.xpose.msra.mxu0 %v128
    %163 = vmatprep.subr.mxu0 0.0
    %164 = vmatpush1.xpose.msra.mxu0 %v131
    %165 = vmatprep.subr.mxu0 0.0
    %166 = vmatpush1.xpose.msra.mxu0 0.0
    %167 = vmatprep.subr.mxu0 0.0
    %168 = vmatpush1.xpose.msra.mxu0 0.0
    %169 = vmatprep.subr.mxu0 0.0
    %170 = vmatpush1.xpose.msra.mxu0 0.0
    %171 = vmatprep.subr.mxu0 0.0
    %172 = vmatpush1.xpose.msra.mxu0 0.0
    %173 = vmatprep.subr.mxu0 0.0
    %174 = vmatpush1.xpose.msra.mxu0 0.0
    %175 = vmatprep.subr.mxu0 0.0
    %176 = vmatpush1.xpose.msra.mxu0 0.0
    %177 = vmatprep.subr.mxu0 0.0
    %178 = vmatpush1.xpose.msra.mxu0 0.0
    %179 = vmatprep.subr.mxu0 0.0
    %180 = vmatpush1.xpose.msra.mxu0 0.0
    %181 = vmatprep.subr.mxu0 0.0
    %182 = vmatpush1.xpose.msra.mxu0 0.0
    %183 = vmatprep.subr.mxu0 0.0
    %184 = vmatpush1.xpose.msra.mxu0 0.0
    %185 = vmatprep.subr.mxu0 0.0
    %186 = vmatpush1.xpose.msra.mxu0 0.0
    %187 = vmatprep.subr.mxu0 0.0
    %188 = vmatpush1.xpose.msra.mxu0 0.0
    %189 = vmatprep.subr.mxu0 0.0
    %190 = vmatpush1.xpose.msra.mxu0 0.0
    %191 = vmatprep.subr.mxu0 0.0
    %192 = vmatpush1.xpose.msra.mxu0 0.0
    %193 = vmatprep.subr.mxu0 0.0
    %194 = vmatpush1.xpose.msra.mxu0 0.0
    %195 = vmatprep.subr.mxu0 0.0
    %196 = vmatpush1.xpose.msra.mxu0 0.0
    %197 = vmatprep.mubr.f32.mxu0 0.0
    %198 = vmatmul.mubr.f32.gmra.mrb[0].mxu0 %v77
    %v199 = vpop.f32.mrb[0].mxu0
    %v200 = vadd.f32 %v63, %v199
    %v201 = vpop.f32.mrb[0].mxu0
    %202 = vmatprep.mubr.f32.mxu0 0.0
    %203 = vmatmul.mubr.f32.gmra.mrb[0].mxu0 %v80
    %v204 = vpop.f32.mrb[0].mxu0
    %v205 = vadd.f32 %v68, %v204
    %v206 = vpop.f32.mrb[0].mxu0
    %207 = vmatprep.mubr.f32.mxu0 0.0
    %208 = vmatmul.mubr.f32.gmra.mrb[0].mxu0 %v83
    %v209 = vpop.f32.mrb[0].mxu0
    %v210 = vadd.f32 %v73, %v209
    %v211 = vpop.f32.mrb[0].mxu0
    %212 = vdwg.mxu0
    %vm213 = vcmp.gt.f32.partialorder %v200, 0.0
    %vm214 = vcmp.gt.f32.partialorder %v205, 0.0
    %vm215 = vcmp.gt.f32.partialorder %v210, 0.0
    %v216 = vstv %s37
    %v217 = vmul.f32 %v216, %v200
    %v218 = vmul.f32 %v216, %v205
    %v219 = vmul.f32 %v216, %v210
    %v220 = vsel %vm213, %v200, %v217
    %v221 = vsel %vm214, %v205, %v218
    %v222 = vsel %vm215, %v210, %v219
    %v223 = vld [vmem:[%s3] sm:$0xff]
    %v224 = vld [vmem:[%s3 + $0x8] sm:$0xff]
    %v225 = vld [vmem:[%s3 + $0x10] sm:$0xff]
    %v226 = vld [vmem:[%s3 + $0x18] sm:$0xff]
    %v227 = vld [vmem:[%s3 + $0x20] sm:$0xff]
    %v228 = vld [vmem:[%s4] sm:$0xff]
    %v229 = vld [vmem:[%s4 + $0x8] sm:$0xff]
    %v230 = vld [vmem:[%s4 + $0x10] sm:$0xff]
    %v231 = vld [vmem:[%s4 + $0x18] sm:$0xff]
    %v232 = vld [vmem:[%s4 + $0x20] sm:$0xff]
    %234 = vset.pattern.permute.xlu0 0
    %235 = vperm.xlu0 %234, %v228
    %v236 = vpop.permute.xlu0 %235
    %239 = vset.pattern.permute.xlu0 0
    %240 = vperm.xlu0 %239, %v229
    %v241 = vpop.permute.xlu0 %240
    %244 = vset.pattern.permute.xlu0 0
    %245 = vperm.xlu0 %244, %v230
    %v246 = vpop.permute.xlu0 %245
    %249 = vset.pattern.permute.xlu0 0
    %250 = vperm.xlu0 %249, %v231
    %v251 = vpop.permute.xlu0 %250
    %254 = vset.pattern.permute.xlu0 0
    %255 = vperm.xlu0 %254, %v232
    %v256 = vpop.permute.xlu0 %255
    %vm258 = vcmask 162816
    %v260 = vsel %vm258, %v223, 0
    %v263 = vsel %vm258, %v224, 0
    %v266 = vsel %vm258, %v225, 0
    %v269 = vsel %vm258, %v226, 0
    %v272 = vsel %vm258, %v227, 0
    %vm274 = vcmask 1043456
    %v276 = vsel %vm274, %v222, 0
    %278 = vmatprep.subr.mxu0 0.0
    %279 = vmatpush1.msra.mxu0 %v220
    %280 = vmatprep.subr.mxu0 0.0
    %281 = vmatpush1.msra.mxu0 %v221
    %282 = vmatprep.subr.mxu0 0.0
    %283 = vmatpush1.msra.mxu0 %v276
    %284 = vmatprep.subr.mxu0 0.0
    %285 = vmatpush1.msra.mxu0 0.0
    %286 = vmatprep.subr.mxu0 0.0
    %287 = vmatpush1.msra.mxu0 0.0
    %288 = vmatprep.subr.mxu0 0.0
    %289 = vmatpush1.msra.mxu0 0.0
    %290 = vmatprep.subr.mxu0 0.0
    %291 = vmatpush1.msra.mxu0 0.0
    %292 = vmatprep.subr.mxu0 0.0
    %293 = vmatpush1.msra.mxu0 0.0
    %294 = vmatprep.subr.mxu0 0.0
    %295 = vmatpush1.msra.mxu0 0.0
    %296 = vmatprep.subr.mxu0 0.0
    %297 = vmatpush1.msra.mxu0 0.0
    %298 = vmatprep.subr.mxu0 0.0
    %299 = vmatpush1.msra.mxu0 0.0
    %300 = vmatprep.subr.mxu0 0.0
    %301 = vmatpush1.msra.mxu0 0.0
    %302 = vmatprep.subr.mxu0 0.0
    %303 = vmatpush1.msra.mxu0 0.0
    %304 = vmatprep.subr.mxu0 0.0
    %305 = vmatpush1.msra.mxu0 0.0
    %306 = vmatprep.subr.mxu0 0.0
    %307 = vmatpush1.msra.mxu0 0.0
    %308 = vmatprep.subr.mxu0 0.0
    %309 = vmatpush1.msra.mxu0 0.0
    %310 = vmatprep.subr.mxu0 0.0
    %311 = vmatpush1.msra.mxu0 0.0
    %312 = vmatprep.subr.mxu0 0.0
    %313 = vmatpush1.msra.mxu0 0.0
    %314 = vmatprep.subr.mxu0 0.0
    %315 = vmatpush1.msra.mxu0 0.0
    %316 = vmatprep.subr.mxu0 0.0
    %317 = vmatpush1.msra.mxu0 0.0
    %318 = vmatprep.subr.mxu0 0.0
    %319 = vmatpush1.msra.mxu0 0.0
    %320 = vmatprep.subr.mxu0 0.0
    %321 = vmatpush1.msra.mxu0 0.0
    %322 = vmatprep.subr.mxu0 0.0
    %323 = vmatpush1.msra.mxu0 0.0
    %324 = vmatprep.subr.mxu0 0.0
    %325 = vmatpush1.msra.mxu0 0.0
    %326 = vmatprep.subr.mxu0 0.0
    %327 = vmatpush1.msra.mxu0 0.0
    %328 = vmatprep.subr.mxu0 0.0
    %329 = vmatpush1.msra.mxu0 0.0
    %330 = vmatprep.subr.mxu0 0.0
    %331 = vmatpush1.msra.mxu0 0.0
    %332 = vmatprep.subr.mxu0 0.0
    %333 = vmatpush1.msra.mxu0 0.0
    %334 = vmatprep.subr.mxu0 0.0
    %335 = vmatpush1.msra.mxu0 0.0
    %336 = vmatprep.subr.mxu0 0.0
    %337 = vmatpush1.msra.mxu0 0.0
    %338 = vmatprep.subr.mxu0 0.0
    %339 = vmatpush1.msra.mxu0 0.0
    %340 = vmatprep.subr.mxu0 0.0
    %341 = vmatpush1.msra.mxu0 0.0
    %342 = vmatprep.mubr.f32.mxu0 0.0
    %343 = vmatmul.mubr.f32.gmra.mrb[0].mxu0 %v260
    %v344 = vpop.f32.mrb[0].mxu0
    %v345 = vadd.f32 %v236, %v344
    %v346 = vpop.f32.mrb[0].mxu0
    %347 = vmatprep.mubr.f32.mxu0 0.0
    %348 = vmatmul.mubr.f32.gmra.mrb[0].mxu0 %v263
    %v349 = vpop.f32.mrb[0].mxu0
    %v350 = vadd.f32 %v241, %v349
    %v351 = vpop.f32.mrb[0].mxu0
    %352 = vmatprep.mubr.f32.mxu0 0.0
    %353 = vmatmul.mubr.f32.gmra.mrb[0].mxu0 %v266
    %v354 = vpop.f32.mrb[0].mxu0
    %v355 = vadd.f32 %v246, %v354
    %v356 = vpop.f32.mrb[0].mxu0
    %357 = vmatprep.mubr.f32.mxu0 0.0
    %358 = vmatmul.mubr.f32.gmra.mrb[0].mxu0 %v269
    %v359 = vpop.f32.mrb[0].mxu0
    %v360 = vadd.f32 %v251, %v359
    %v361 = vpop.f32.mrb[0].mxu0
    %362 = vmatprep.mubr.f32.mxu0 0.0
    %363 = vmatmul.mubr.f32.gmra.mrb[0].mxu0 %v272
    %v364 = vpop.f32.mrb[0].mxu0
    %v365 = vadd.f32 %v256, %v364
    %v366 = vpop.f32.mrb[0].mxu0
    %367 = vdwg.mxu0
    %vm368 = vcmp.gt.f32.partialorder %v345, 0.0
    %vm369 = vcmp.gt.f32.partialorder %v350, 0.0
    %vm370 = vcmp.gt.f32.partialorder %v355, 0.0
    %vm371 = vcmp.gt.f32.partialorder %v360, 0.0
    %vm372 = vcmp.gt.f32.partialorder %v365, 0.0
    %v373 = vmul.f32 %v216, %v345
    %v374 = vmul.f32 %v216, %v350
    %v375 = vmul.f32 %v216, %v355
    %v376 = vmul.f32 %v216, %v360
    %v377 = vmul.f32 %v216, %v365
    %v378 = vsel %vm368, %v345, %v373
    %v379 = vsel %vm369, %v350, %v374
    %v380 = vsel %vm370, %v355, %v375
    %v381 = vsel %vm371, %v360, %v376
    %v382 = vsel %vm372, %v365, %v377
    %v383 = vld [vmem:[%s5] sm:$0xff]
    %v384 = vld [vmem:[%s5 + $0x8] sm:$0xff]
    %v385 = vld [vmem:[%s5 + $0x10] sm:$0xf]
    %v386 = vld [vmem:[%s6] sm:$0xff]
    %v387 = vld [vmem:[%s6 + $0x8] sm:$0xff]
    %v388 = vld [vmem:[%s6 + $0x10] sm:$0xf]
    %390 = vset.pattern.permute.xlu0 0
    %391 = vperm.xlu0 %390, %v386
    %v392 = vpop.permute.xlu0 %391
    %395 = vset.pattern.permute.xlu0 0
    %396 = vperm.xlu0 %395, %v387
    %v397 = vpop.permute.xlu0 %396
    %400 = vset.pattern.permute.xlu0 0
    %401 = vperm.xlu0 %400, %v388
    %v402 = vpop.permute.xlu0 %401
    %vm404 = vcmask 326656
    %v406 = vsel %vm404, %v383, 0
    %v409 = vsel %vm404, %v384, 0
    %v412 = vsel %vm404, %v385, 0
    %414 = vmatprep.subr.mxu0 0.0
    %415 = vmatpush1.msra.mxu0 %v378
    %416 = vmatprep.subr.mxu0 0.0
    %417 = vmatpush1.msra.mxu0 %v379
    %418 = vmatprep.subr.mxu0 0.0
    %419 = vmatpush1.msra.mxu0 %v380
    %420 = vmatprep.subr.mxu0 0.0
    %421 = vmatpush1.msra.mxu0 %v381
    %422 = vmatprep.subr.mxu0 0.0
    %423 = vmatpush1.msra.mxu0 %v382
    %424 = vmatprep.subr.mxu0 0.0
    %425 = vmatpush1.msra.mxu0 0.0
    %426 = vmatprep.subr.mxu0 0.0
    %427 = vmatpush1.msra.mxu0 0.0
    %428 = vmatprep.subr.mxu0 0.0
    %429 = vmatpush1.msra.mxu0 0.0
    %430 = vmatprep.subr.mxu0 0.0
    %431 = vmatpush1.msra.mxu0 0.0
    %432 = vmatprep.subr.mxu0 0.0
    %433 = vmatpush1.msra.mxu0 0.0
    %434 = vmatprep.subr.mxu0 0.0
    %435 = vmatpush1.msra.mxu0 0.0
    %436 = vmatprep.subr.mxu0 0.0
    %437 = vmatpush1.msra.mxu0 0.0
    %438 = vmatprep.subr.mxu0 0.0
    %439 = vmatpush1.msra.mxu0 0.0
    %440 = vmatprep.subr.mxu0 0.0
    %441 = vmatpush1.msra.mxu0 0.0
    %442 = vmatprep.subr.mxu0 0.0
    %443 = vmatpush1.msra.mxu0 0.0
    %444 = vmatprep.subr.mxu0 0.0
    %445 = vmatpush1.msra.mxu0 0.0
    %446 = vmatprep.subr.mxu0 0.0
    %447 = vmatpush1.msra.mxu0 0.0
    %448 = vmatprep.subr.mxu0 0.0
    %449 = vmatpush1.msra.mxu0 0.0
    %450 = vmatprep.subr.mxu0 0.0
    %451 = vmatpush1.msra.mxu0 0.0
    %452 = vmatprep.subr.mxu0 0.0
    %453 = vmatpush1.msra.mxu0 0.0
    %454 = vmatprep.subr.mxu0 0.0
    %455 = vmatpush1.msra.mxu0 0.0
    %456 = vmatprep.subr.mxu0 0.0
    %457 = vmatpush1.msra.mxu0 0.0
    %458 = vmatprep.subr.mxu0 0.0
    %459 = vmatpush1.msra.mxu0 0.0
    %460 = vmatprep.subr.mxu0 0.0
    %461 = vmatpush1.msra.mxu0 0.0
    %462 = vmatprep.subr.mxu0 0.0
    %463 = vmatpush1.msra.mxu0 0.0
    %464 = vmatprep.subr.mxu0 0.0
    %465 = vmatpush1.msra.mxu0 0.0
    %466 = vmatprep.subr.mxu0 0.0
    %467 = vmatpush1.msra.mxu0 0.0
    %468 = vmatprep.subr.mxu0 0.0
    %469 = vmatpush1.msra.mxu0 0.0
    %470 = vmatprep.subr.mxu0 0.0
    %471 = vmatpush1.msra.mxu0 0.0
    %472 = vmatprep.subr.mxu0 0.0
    %473 = vmatpush1.msra.mxu0 0.0
    %474 = vmatprep.subr.mxu0 0.0
    %475 = vmatpush1.msra.mxu0 0.0
    %476 = vmatprep.subr.mxu0 0.0
    %477 = vmatpush1.msra.mxu0 0.0
    %478 = vmatprep.mubr.f32.mxu0 0.0
    %479 = vmatmul.mubr.f32.gmra.mrb[0].mxu0 %v406
    %v480 = vpop.f32.mrb[0].mxu0
    %v481 = vadd.f32 %v392, %v480
    %v482 = vpop.f32.mrb[0].mxu0
    %483 = vmatprep.mubr.f32.mxu0 0.0
    %484 = vmatmul.mubr.f32.gmra.mrb[0].mxu0 %v409
    %v485 = vpop.f32.mrb[0].mxu0
    %v486 = vadd.f32 %v397, %v485
    %v487 = vpop.f32.mrb[0].mxu0
    %488 = vmatprep.mubr.f32.mxu0 0.0
    %489 = vmatmul.mubr.f32.gmra.mrb[0].mxu0 %v412
    %v490 = vpop.f32.mrb[0].mxu0
    %v491 = vadd.f32 %v402, %v490
    %v492 = vpop.f32.mrb[0].mxu0
    %493 = vdwg.mxu0
    %vm494 = vcmp.gt.f32.partialorder %v481, 0.0
    %vm495 = vcmp.gt.f32.partialorder %v486, 0.0
    %vm496 = vcmp.gt.f32.partialorder %v491, 0.0
    %v497 = vmul.f32 %v216, %v481
    %v498 = vmul.f32 %v216, %v486
    %v499 = vmul.f32 %v216, %v491
    %v500 = vsel %vm494, %v481, %v497
    %v501 = vsel %vm495, %v486, %v498
    %v502 = vsel %vm496, %v491, %v499
    %v503 = vld [vmem:[%s7] sm:$0x3]
    %v504 = vld [vmem:[%s8] sm:$0x3]
    %506 = vset.pattern.permute.xlu0 0
    %507 = vperm.xlu0 %506, %v504
    %v508 = vpop.permute.xlu0 %507
    %v511 = vsel %vm258, %v503, 0
    %v514 = vsel %vm274, %v502, 0
    %516 = vmatprep.subr.mxu0 0.0
    %517 = vmatpush1.msra.mxu0 %v500
    %518 = vmatprep.subr.mxu0 0.0
    %519 = vmatpush1.msra.mxu0 %v501
    %520 = vmatprep.subr.mxu0 0.0
    %521 = vmatpush1.msra.mxu0 %v514
    %522 = vmatprep.subr.mxu0 0.0
    %523 = vmatpush1.msra.mxu0 0.0
    %524 = vmatprep.subr.mxu0 0.0
    %525 = vmatpush1.msra.mxu0 0.0
    %526 = vmatprep.subr.mxu0 0.0
    %527 = vmatpush1.msra.mxu0 0.0
    %528 = vmatprep.subr.mxu0 0.0
    %529 = vmatpush1.msra.mxu0 0.0
    %530 = vmatprep.subr.mxu0 0.0
    %531 = vmatpush1.msra.mxu0 0.0
    %532 = vmatprep.subr.mxu0 0.0
    %533 = vmatpush1.msra.mxu0 0.0
    %534 = vmatprep.subr.mxu0 0.0
    %535 = vmatpush1.msra.mxu0 0.0
    %536 = vmatprep.subr.mxu0 0.0
    %537 = vmatpush1.msra.mxu0 0.0
    %538 = vmatprep.subr.mxu0 0.0
    %539 = vmatpush1.msra.mxu0 0.0
    %540 = vmatprep.subr.mxu0 0.0
    %541 = vmatpush1.msra.mxu0 0.0
    %542 = vmatprep.subr.mxu0 0.0
    %543 = vmatpush1.msra.mxu0 0.0
    %544 = vmatprep.subr.mxu0 0.0
    %545 = vmatpush1.msra.mxu0 0.0
    %546 = vmatprep.subr.mxu0 0.0
    %547 = vmatpush1.msra.mxu0 0.0
    %548 = vmatprep.subr.mxu0 0.0
    %549 = vmatpush1.msra.mxu0 0.0
    %550 = vmatprep.subr.mxu0 0.0
    %551 = vmatpush1.msra.mxu0 0.0
    %552 = vmatprep.subr.mxu0 0.0
    %553 = vmatpush1.msra.mxu0 0.0
    %554 = vmatprep.subr.mxu0 0.0
    %555 = vmatpush1.msra.mxu0 0.0
    %556 = vmatprep.subr.mxu0 0.0
    %557 = vmatpush1.msra.mxu0 0.0
    %558 = vmatprep.subr.mxu0 0.0
    %559 = vmatpush1.msra.mxu0 0.0
    %560 = vmatprep.subr.mxu0 0.0
    %561 = vmatpush1.msra.mxu0 0.0
    %562 = vmatprep.subr.mxu0 0.0
    %563 = vmatpush1.msra.mxu0 0.0
    %564 = vmatprep.subr.mxu0 0.0
    %565 = vmatpush1.msra.mxu0 0.0
    %566 = vmatprep.subr.mxu0 0.0
    %567 = vmatpush1.msra.mxu0 0.0
    %568 = vmatprep.subr.mxu0 0.0
    %569 = vmatpush1.msra.mxu0 0.0
    %570 = vmatprep.subr.mxu0 0.0
    %571 = vmatpush1.msra.mxu0 0.0
    %572 = vmatprep.subr.mxu0 0.0
    %573 = vmatpush1.msra.mxu0 0.0
    %574 = vmatprep.subr.mxu0 0.0
    %575 = vmatpush1.msra.mxu0 0.0
    %576 = vmatprep.subr.mxu0 0.0
    %577 = vmatpush1.msra.mxu0 0.0
    %578 = vmatprep.subr.mxu0 0.0
    %579 = vmatpush1.msra.mxu0 0.0
    %580 = vmatprep.mubr.f32.mxu0 0.0
    %581 = vmatmul.mubr.f32.gmra.mrb[0].mxu0 %v511
    %v582 = vpop.f32.mrb[0].mxu0
    %v583 = vadd.f32 %v508, %v582
    %v584 = vpop.f32.mrb[0].mxu0
    %585 = vdwg.mxu0
    %586 = vst [vmem:[#allocation3] sm:$0x3] %v583
    // Predicated region
    $region42: #{tpu_custom_call.1} parent=1 // pred_check
      _
    $region43: #{tpu_custom_call.1} parent=1 // pred_check_branch
      %588 = sbr.rel (0) target = $region45
    $region44: #{tpu_custom_call.1} parent=1 // pred_region
      %s590 = ssub.s32 32, 32
      %591 = vsyncadd [#allocation4], %s590
      %s593 = sshll.u32 [#allocation3], 4
      %s594 = int_to_ptr.vmem [resolvable:$true] %s593
      %596 = dma.vmem_to_hbm [thread:$0]  %s594, 32, %s10, [#allocation4]
    $region45: #{tpu_custom_call.1} parent=1 // pred_fallthru
      _
    // Predicated region
    $region46: #{tpu_custom_call.1} parent=1 // pred_check
      _
    $region47: #{tpu_custom_call.1} parent=1 // pred_check_branch
      %598 = sbr.rel (0) target = $region49
    $region48: #{tpu_custom_call.1} parent=1 // pred_region
      %599 = dma.done [#allocation4], 32
    $region49: #{tpu_custom_call.1} parent=1 // pred_fallthru
      _
    %600 = vsyncpa [#allocation4], 1

</llo_original>
